<compile_context>
chip_gen: v7x
topology: tpu7x:2x2x1
jax: 0.10.0
libtpu: 0.0.40
codegen_flags: <defaults>
</compile_context>

<pallas_src>
import jax
import jax.numpy as jnp
from jax import lax
from jax.experimental import pallas as pl
from jax.experimental.pallas import tpu as pltpu

BN_EPS = 1e-5
DROP_P = 0.9
DROP_SCALE = 1.0 / (1.0 - DROP_P)                       # 10.0
KEEP_THRESH = int((1.0 - DROP_P) * (1 << 32))           # uint32 keep threshold


def cont_model_kernel(x_ref, w_ref, b_ref, gamma_ref, beta_ref, bits_ref, o_ref):
    # ---- Linear + ReLU (bf16 MXU inputs, f32 accumulate) ----
    h = jnp.dot(
        x_ref[...].astype(jnp.bfloat16),
        w_ref[...].astype(jnp.bfloat16),
        preferred_element_type=jnp.float32,
    )
    h = jnp.maximum(h + b_ref[...], 0.0)                # (B, TILE_N)

    # ---- BatchNorm1d, training mode: single-pass per-feature batch stats ----
    inv_b = 1.0 / h.shape[0]
    mean = jnp.sum(h, axis=0, keepdims=True) * inv_b            # E[x]
    ex2 = jnp.sum(h * h, axis=0, keepdims=True) * inv_b         # E[x^2]
    var = jnp.maximum(ex2 - mean * mean, 0.0)                   # biased variance
    hn = (h - mean) * lax.rsqrt(var + BN_EPS)

    # ---- Dropout (training): fold 1/(1-p) into the affine params ----
    g = gamma_ref[...] * DROP_SCALE                              # (1, TILE_N)
    bt = beta_ref[...] * DROP_SCALE                              # (1, TILE_N)
    keep = bits_ref[...] < jnp.uint32(KEEP_THRESH)               # integer-domain mask
    o_ref[...] = jnp.where(keep, hn * g + bt, 0.0)


def cont_model_forward(x, w, b, gamma, beta, dropout_key, *, tile_n=512):
    """x:(B,IN)  w:(IN,OUT)  b/gamma/beta:(OUT,)  dropout_key: jax PRNG key."""
    B, inp = x.shape
    out = w.shape[1]

    # Pad the feature axis to a lane-dense multiple of 128 (and of tile_n).
    outp = ((out + 127) // 128) * 128
    tile_n = min(tile_n, outp)
    if outp % tile_n:
        outp = ((outp + tile_n - 1) // tile_n) * tile_n
    pad = outp - out

    w_p = jnp.pad(w, ((0, 0), (0, pad)))
    b_p = jnp.pad(b.reshape(1, -1), ((0, 0), (0, pad)))
    g_p = jnp.pad(gamma.reshape(1, -1), ((0, 0), (0, pad)), constant_values=1.0)
    be_p = jnp.pad(beta.reshape(1, -1), ((0, 0), (0, pad)))
    bits = jax.random.bits(dropout_key, (B, outp), dtype=jnp.uint32)

    num_tiles = outp // tile_n
    out_full = pl.pallas_call(
        cont_model_kernel,
        out_shape=jax.ShapeDtypeStruct((B, outp), jnp.float32),
        grid=(num_tiles,),
        in_specs=[
            pl.BlockSpec((B, inp), lambda j: (0, 0)),        # x (replicated per tile)
            pl.BlockSpec((inp, tile_n), lambda j: (0, j)),   # weight tile
            pl.BlockSpec((1, tile_n), lambda j: (0, j)),     # bias tile
            pl.BlockSpec((1, tile_n), lambda j: (0, j)),     # gamma tile
            pl.BlockSpec((1, tile_n), lambda j: (0, j)),     # beta tile
            pl.BlockSpec((B, tile_n), lambda j: (0, j)),     # dropout bits tile
        ],
        out_specs=pl.BlockSpec((B, tile_n), lambda j: (0, j)),
        compiler_params=pltpu.CompilerParams(
            dimension_semantics=("parallel",),
        ),
    )(x, w_p, b_p, g_p, be_p, bits)

    return out_full[:, :out]


if __name__ == "__main__":
    B, INP_SIZE, OUT_SIZE = 8, 32, 32

    key = jax.random.PRNGKey(0)
    kx, kw, kb, kd = jax.random.split(key, 4)

    # PyTorch-style uniform(-1/sqrt(in), 1/sqrt(in)) init for the Linear layer.
    x = jax.random.normal(kx, (B, INP_SIZE), dtype=jnp.float32)
    bound = 1.0 / (INP_SIZE ** 0.5)
    w = jax.random.uniform(kw, (INP_SIZE, OUT_SIZE), jnp.float32, -bound, bound)
    b = jax.random.uniform(kb, (OUT_SIZE,), jnp.float32, -bound, bound)
    gamma = jnp.ones((OUT_SIZE,), dtype=jnp.float32)    # BN weight init
    beta = jnp.zeros((OUT_SIZE,), dtype=jnp.float32)    # BN bias init

    out = cont_model_forward(x, w, b, gamma, beta, kd)
    jax.block_until_ready(out)
    assert out.shape == (B, OUT_SIZE)
    assert bool(jnp.all(jnp.isfinite(out)))
    print("KERNEL_OK")
</pallas_src>

<mosaic_0001>
module attributes {stable_mosaic.version = 11 : i64} {
  func.func @cont_model_kernel(%arg0: i32, %arg1: memref<8x32xf32, #tpu.memory_space<vmem>>, %arg2: memref<32x128xf32, #tpu.memory_space<vmem>>, %arg3: memref<1x128xf32, #tpu.memory_space<vmem>>, %arg4: memref<1x128xf32, #tpu.memory_space<vmem>>, %arg5: memref<1x128xf32, #tpu.memory_space<vmem>>, %arg6: memref<8x128xi32, #tpu.memory_space<vmem>>, %arg7: memref<8x128xf32, #tpu.memory_space<vmem>>) attributes {dimension_semantics = [#tpu.dimension_semantics<parallel>], iteration_bounds = array<i64: 1>, scalar_prefetch = 0 : i64, scratch_operands = 0 : i64, tpu.core_type = #tpu.core_type<tc>, window_params = [{pipeline_mode = #tpu.pipeline_mode<synchronous>, transform_indices = @transform_0, window_bounds = array<i64: 8, 32>}, {transform_indices = @transform_1, window_bounds = array<i64: 32, 128>}, {transform_indices = @transform_2, window_bounds = array<i64: 1, 128>}, {transform_indices = @transform_3, window_bounds = array<i64: 1, 128>}, {transform_indices = @transform_4, window_bounds = array<i64: 1, 128>}, {transform_indices = @transform_5, window_bounds = array<i64: 8, 128>}, {transform_indices = @transform_6, window_bounds = array<i64: 8, 128>}]} {
    %c0 = arith.constant 0 : index
    %c0_0 = arith.constant 0 : index
    %0 = vector.load %arg1[%c0, %c0_0] : memref<8x32xf32, #tpu.memory_space<vmem>>, vector<8x32xf32>
    %1 = arith.truncf %0 : vector<8x32xf32> to vector<8x32xbf16>
    %c0_1 = arith.constant 0 : index
    %c0_2 = arith.constant 0 : index
    %2 = vector.load %arg2[%c0_1, %c0_2] : memref<32x128xf32, #tpu.memory_space<vmem>>, vector<32x128xf32>
    %3 = arith.truncf %2 : vector<32x128xf32> to vector<32x128xbf16>
    %cst = arith.constant dense<0.000000e+00> : vector<8x128xf32>
    %4 = tpu.matmul %1, %3, %cst {dimension_numbers = #tpu.dot_dimension_numbers<[1], [0], [0], [1], [0, 0, 1, 1], [], []>} : vector<8x32xbf16>, vector<32x128xbf16>, vector<8x128xf32> -> vector<8x128xf32>
    %c0_3 = arith.constant 0 : index
    %c0_4 = arith.constant 0 : index
    %5 = vector.load %arg3[%c0_3, %c0_4] : memref<1x128xf32, #tpu.memory_space<vmem>>, vector<1x128xf32>
    %6 = vector.broadcast %5 : vector<1x128xf32> to vector<8x128xf32>
    %7 = arith.addf %4, %6 : vector<8x128xf32>
    %cst_5 = arith.constant 0.000000e+00 : f32
    %8 = vector.broadcast %cst_5 : f32 to vector<8x128xf32>
    %9 = arith.maximumf %7, %8 : vector<8x128xf32>
    %cst_6 = arith.constant dense<0.000000e+00> : vector<128xf32>
    %10 = vector.multi_reduction <add>, %9, %cst_6 [0] : vector<8x128xf32> to vector<128xf32>
    %11 = vector.shape_cast %10 : vector<128xf32> to vector<1x128xf32>
    %cst_7 = arith.constant 1.250000e-01 : f32
    %12 = vector.broadcast %cst_7 : f32 to vector<1x128xf32>
    %13 = arith.mulf %11, %12 : vector<1x128xf32>
    %14 = arith.mulf %9, %9 : vector<8x128xf32>
    %cst_8 = arith.constant dense<0.000000e+00> : vector<128xf32>
    %15 = vector.multi_reduction <add>, %14, %cst_8 [0] : vector<8x128xf32> to vector<128xf32>
    %16 = vector.shape_cast %15 : vector<128xf32> to vector<1x128xf32>
    %cst_9 = arith.constant 1.250000e-01 : f32
    %17 = vector.broadcast %cst_9 : f32 to vector<1x128xf32>
    %18 = arith.mulf %16, %17 : vector<1x128xf32>
    %19 = arith.mulf %13, %13 : vector<1x128xf32>
    %20 = arith.subf %18, %19 : vector<1x128xf32>
    %cst_10 = arith.constant 0.000000e+00 : f32
    %21 = vector.broadcast %cst_10 : f32 to vector<1x128xf32>
    %22 = arith.maximumf %20, %21 : vector<1x128xf32>
    %23 = vector.broadcast %13 : vector<1x128xf32> to vector<8x128xf32>
    %24 = arith.subf %9, %23 : vector<8x128xf32>
    %cst_11 = arith.constant 9.99999974E-6 : f32
    %25 = vector.broadcast %cst_11 : f32 to vector<1x128xf32>
    %26 = arith.addf %22, %25 : vector<1x128xf32>
    %27 = math.rsqrt %26 : vector<1x128xf32>
    %28 = vector.broadcast %27 : vector<1x128xf32> to vector<8x128xf32>
    %29 = arith.mulf %24, %28 : vector<8x128xf32>
    %c0_12 = arith.constant 0 : index
    %c0_13 = arith.constant 0 : index
    %30 = vector.load %arg4[%c0_12, %c0_13] : memref<1x128xf32, #tpu.memory_space<vmem>>, vector<1x128xf32>
    %cst_14 = arith.constant 1.000000e+01 : f32
    %31 = vector.broadcast %cst_14 : f32 to vector<1x128xf32>
    %32 = arith.mulf %30, %31 : vector<1x128xf32>
    %c0_15 = arith.constant 0 : index
    %c0_16 = arith.constant 0 : index
    %33 = vector.load %arg5[%c0_15, %c0_16] : memref<1x128xf32, #tpu.memory_space<vmem>>, vector<1x128xf32>
    %cst_17 = arith.constant 1.000000e+01 : f32
    %34 = vector.broadcast %cst_17 : f32 to vector<1x128xf32>
    %35 = arith.mulf %33, %34 : vector<1x128xf32>
    %c0_18 = arith.constant 0 : index
    %c0_19 = arith.constant 0 : index
    %36 = vector.load %arg6[%c0_18, %c0_19] : memref<8x128xi32, #tpu.memory_space<vmem>>, vector<8x128xi32>
    %c429496729_i32 = arith.constant 429496729 : i32
    %37 = vector.broadcast %c429496729_i32 : i32 to vector<8x128xi32>
    %38 = arith.cmpi ult, %36, %37 : vector<8x128xi32>
    %39 = vector.broadcast %32 : vector<1x128xf32> to vector<8x128xf32>
    %40 = arith.mulf %29, %39 : vector<8x128xf32>
    %41 = vector.broadcast %35 : vector<1x128xf32> to vector<8x128xf32>
    %42 = arith.addf %40, %41 : vector<8x128xf32>
    %cst_20 = arith.constant 0.000000e+00 : f32
    %43 = vector.broadcast %cst_20 : f32 to vector<8x128xf32>
    %44 = arith.select %38, %42, %43 : vector<8x128xi1>, vector<8x128xf32>
    %c0_21 = arith.constant 0 : index
    %c0_22 = arith.constant 0 : index
    %45 = vector.load %arg7[%c0_21, %c0_22] : memref<8x128xf32, #tpu.memory_space<vmem>>, vector<8x128xf32>
    tpu.vector_store %arg7[%c0_21, %c0_22], %44 {strides = array<i32>} : memref<8x128xf32, #tpu.memory_space<vmem>>, vector<8x128xf32>,
    return
  }
  func.func @transform_0(%arg0: i32) -> (i32, i32) {
    %c0_i32 = arith.constant 0 : i32
    %c0_i32_0 = arith.constant 0 : i32
    %c0_i32_1 = arith.constant 0 : i32
    return %c0_i32, %c0_i32_0 : i32, i32
  }
  func.func @transform_1(%arg0: i32) -> (i32, i32) {
    %c0_i32 = arith.constant 0 : i32
    %c0_i32_0 = arith.constant 0 : i32
    return %c0_i32, %arg0 : i32, i32
  }
  func.func @transform_2(%arg0: i32) -> (i32, i32) {
    %c0_i32 = arith.constant 0 : i32
    %c0_i32_0 = arith.constant 0 : i32
    return %c0_i32, %arg0 : i32, i32
  }
  func.func @transform_3(%arg0: i32) -> (i32, i32) {
    %c0_i32 = arith.constant 0 : i32
    %c0_i32_0 = arith.constant 0 : i32
    return %c0_i32, %arg0 : i32, i32
  }
  func.func @transform_4(%arg0: i32) -> (i32, i32) {
    %c0_i32 = arith.constant 0 : i32
    %c0_i32_0 = arith.constant 0 : i32
    return %c0_i32, %arg0 : i32, i32
  }
  func.func @transform_5(%arg0: i32) -> (i32, i32) {
    %c0_i32 = arith.constant 0 : i32
    %c0_i32_0 = arith.constant 0 : i32
    return %c0_i32, %arg0 : i32, i32
  }
  func.func @transform_6(%arg0: i32) -> (i32, i32) {
    %c0_i32 = arith.constant 0 : i32
    %c0_i32_0 = arith.constant 0 : i32
    return %c0_i32, %arg0 : i32, i32
  }
}

</mosaic_0001>

<llo_original>
// kernel: tpu_custom_call.1
$region0: #{tpu_custom_call.1}
  #allocation0 [shape = 'u32[]', space=smem, size = 0x4, offset = 0x4, fixed_abs, tag = 'smem constant byte address 0x4 - core index']
  #allocation1 [shape = 'u32[144,128]{1,0:T(1,128)}', space=vmem, size = 0x12000, scoped, tag = 'internal scratch']
  %s0 = inlined_call_operand.hbm [shape: f32[8,32], index: 0, kind: input, shape index: {}]
  %s1 = inlined_call_operand.hbm [shape: f32[32,128], index: 1, kind: input, shape index: {}]
  %s2 = inlined_call_operand.vmem [shape: f32[1,128], index: 2, kind: input, shape index: {}]
  %s3 = inlined_call_operand.vmem [shape: f32[1,128], index: 3, kind: input, shape index: {}]
  %s4 = inlined_call_operand.vmem [shape: f32[1,128], index: 4, kind: input, shape index: {}]
  %s5 = inlined_call_operand.vmem [shape: u32[8,128], index: 5, kind: input, shape index: {}]
  %s6 = inlined_call_operand.hbm [shape: f32[8,128], index: 6, kind: output, shape index: {}]
  %s7 = sld [smem:[#allocation0]]
  $region42: #{tpu_custom_call.1} parent=0
    _
  %s9 = ssub.s32 1, %s7
  %s10 = scalar_select 0, %s9, %s7
  $region1: #{tpu_custom_call.1} parent=0
    #allocation2 [shape = 'u8[4096]{0}', space=vmem, size = 0x1000, scoped, tag = 'input window, operand 0, single buffered']
    #allocation3 [shape = 's32[1]{0}', space=sflag, size = 0x4, scoped, tag = 'scoped memory for tpu_custom_call.1']
    #allocation4 [shape = 's32[1]{0}', space=sflag, size = 0x4, scoped, tag = 'scoped memory for tpu_custom_call.1']
    #allocation5 [shape = 'u8[16384]{0}', space=vmem, size = 0x4000, scoped, tag = 'input window, operand 1, single buffered']
    #allocation6 [shape = 's32[1]{0}', space=sflag, size = 0x4, scoped, tag = 'scoped memory for tpu_custom_call.1']
    #allocation7 [shape = 'u8[4096]{0}', space=vmem, size = 0x1000, scoped, tag = 'output window, operand 0, single buffered']
    %11 = vsyncpa [#allocation3], 0
    %12 = vsyncpa [#allocation6], 0
    %13 = vsyncpa [#allocation4], 0
    // Predicated region
    $region2: #{tpu_custom_call.1} parent=1 // pred_check
      _
    $region3: #{tpu_custom_call.1} parent=1 // pred_check_branch
      %15 = sbr.rel (0) target = $region5
    $region4: #{tpu_custom_call.1} parent=1 // pred_region
      %s17 = ssub.s32 128, 128
      %18 = vsyncadd [#allocation3], %s17
      %s20 = sshll.u32 [#allocation2], 4
      %s21 = int_to_ptr.vmem [resolvable:$true] %s20
      %23 = dma.hbm_to_vmem [thread:$0]  %s0, 128, %s21, [#allocation3]
    $region5: #{tpu_custom_call.1} parent=1 // pred_fallthru
      _
    // Predicated region
    $region6: #{tpu_custom_call.1} parent=1 // pred_check
      _
    $region7: #{tpu_custom_call.1} parent=1 // pred_check_branch
      %25 = sbr.rel (0) target = $region9
    $region8: #{tpu_custom_call.1} parent=1 // pred_region
      %s27 = ssub.s32 512, 512
      %28 = vsyncadd [#allocation6], %s27
      %s29 = sshll.u32 [#allocation5], 4
      %s30 = int_to_ptr.vmem [resolvable:$true] %s29
      %35 = dma.hbm_to_vmem [thread:$0]  %s1, 512, %s30, [#allocation6], 128, 128, 8
    $region9: #{tpu_custom_call.1} parent=1 // pred_fallthru
      _
    // Predicated region
    $region10: #{tpu_custom_call.1} parent=1 // pred_check
      _
    $region11: #{tpu_custom_call.1} parent=1 // pred_check_branch
      %37 = sbr.rel (0) target = $region13
    $region12: #{tpu_custom_call.1} parent=1 // pred_region
      _
    $region13: #{tpu_custom_call.1} parent=1 // pred_fallthru
      _
    // Predicated region
    $region14: #{tpu_custom_call.1} parent=1 // pred_check
      _
    $region15: #{tpu_custom_call.1} parent=1 // pred_check_branch
      %39 = sbr.rel (0) target = $region17
    $region16: #{tpu_custom_call.1} parent=1 // pred_region
      _
    $region17: #{tpu_custom_call.1} parent=1 // pred_fallthru
      _
    // Predicated region
    $region18: #{tpu_custom_call.1} parent=1 // pred_check
      _
    $region19: #{tpu_custom_call.1} parent=1 // pred_check_branch
      %41 = sbr.rel (0) target = $region21
    $region20: #{tpu_custom_call.1} parent=1 // pred_region
      _
    $region21: #{tpu_custom_call.1} parent=1 // pred_fallthru
      _
    // Predicated region
    $region22: #{tpu_custom_call.1} parent=1 // pred_check
      _
    $region23: #{tpu_custom_call.1} parent=1 // pred_check_branch
      %43 = sbr.rel (0) target = $region25
    $region24: #{tpu_custom_call.1} parent=1 // pred_region
      _
    $region25: #{tpu_custom_call.1} parent=1 // pred_fallthru
      _
    // Predicated region
    $region26: #{tpu_custom_call.1} parent=1 // pred_check
      _
    $region27: #{tpu_custom_call.1} parent=1 // pred_check_branch
      %45 = sbr.rel (0) target = $region29
    $region28: #{tpu_custom_call.1} parent=1 // pred_region
      %46 = dma.done [#allocation3], 128
    $region29: #{tpu_custom_call.1} parent=1 // pred_fallthru
      _
    // Predicated region
    $region30: #{tpu_custom_call.1} parent=1 // pred_check
      _
    $region31: #{tpu_custom_call.1} parent=1 // pred_check_branch
      %48 = sbr.rel (0) target = $region33
    $region32: #{tpu_custom_call.1} parent=1 // pred_region
      %49 = dma.done [#allocation6], 512
    $region33: #{tpu_custom_call.1} parent=1 // pred_fallthru
      _
    %v51 = vld [vmem:[#allocation2] sm:$0xff]
    %v52 = vpack.c.bf16 %v51, %v51
    %v53 = vld [vmem:[#allocation5] sm:$0xff]
    %v54 = vld [vmem:[#allocation5 + $0x8] sm:$0xff]
    %v55 = vld [vmem:[#allocation5 + $0x10] sm:$0xff]
    %v56 = vld [vmem:[#allocation5 + $0x18] sm:$0xff]
    %v57 = vpack.c.bf16 %v54, %v53
    %v58 = vpack.c.bf16 %v56, %v55
    %v59 = vld [vmem:[%s2] sm:$0x1]
    %v61 = vlaneseq
    %v62 = vshrl.u32 %v61, 7
    %v63 = vsub.s32 0, %v62
    %v64 = vrot.slane %v59, %v63
    %vm66 = vcmask 261120
    %v68 = vsel %vm66, %v52, 0
    %70 = vmatprep.subr.bf16.mxu0 0
    %71 = vmatpush1.bf16.msra.mxu0 %v57
    %72 = vmatprep.subr.bf16.mxu0 0
    %73 = vmatpush1.bf16.msra.mxu0 %v58
    %74 = vmatprep.subr.bf16.mxu0 0
    %75 = vmatpush1.bf16.msra.mxu0 0
    %76 = vmatprep.subr.bf16.mxu0 0
    %77 = vmatpush1.bf16.msra.mxu0 0
    %78 = vmatprep.subr.bf16.mxu0 0
    %79 = vmatpush1.bf16.msra.mxu0 0
    %80 = vmatprep.subr.bf16.mxu0 0
    %81 = vmatpush1.bf16.msra.mxu0 0
    %82 = vmatprep.subr.bf16.mxu0 0
    %83 = vmatpush1.bf16.msra.mxu0 0
    %84 = vmatprep.subr.bf16.mxu0 0
    %85 = vmatpush1.bf16.msra.mxu0 0
    %86 = vmatprep.subr.bf16.mxu0 0
    %87 = vmatpush1.bf16.msra.mxu0 0
    %88 = vmatprep.subr.bf16.mxu0 0
    %89 = vmatpush1.bf16.msra.mxu0 0
    %90 = vmatprep.subr.bf16.mxu0 0
    %91 = vmatpush1.bf16.msra.mxu0 0
    %92 = vmatprep.subr.bf16.mxu0 0
    %93 = vmatpush1.bf16.msra.mxu0 0
    %94 = vmatprep.subr.bf16.mxu0 0
    %95 = vmatpush1.bf16.msra.mxu0 0
    %96 = vmatprep.subr.bf16.mxu0 0
    %97 = vmatpush1.bf16.msra.mxu0 0
    %98 = vmatprep.subr.bf16.mxu0 0
    %99 = vmatpush1.bf16.msra.mxu0 0
    %100 = vmatprep.subr.bf16.mxu0 0
    %101 = vmatpush1.bf16.msra.mxu0 0
    %102 = vmatprep.mubr.bf16.mxu0 0
    %103 = vmatmul.mubr.bf16.gmra.mrb[0].mxu0 %v68
    %v104 = vpop.f32.mrb[0].mxu0
    %v105 = vadd.f32 %v64, %v104
    %v106 = vpop.f32.mrb[0].mxu0
    %v107 = vpop.f32.mrb[0].mxu0
    %v108 = vpop.f32.mrb[0].mxu0
    %109 = vdwg.mxu0
    %v110 = vmax.f32 %v105, 0.0
    %v111 = vrot.slane %v110, 4
    %v112 = vadd.f32 %v110, %v111
    %v113 = vrot.slane %v112, 2
    %v114 = vadd.f32 %v112, %v113
    %v115 = vrot.slane %v114, 1
    %v116 = vadd.f32 %v114, %v115
    %v117 = vmul.f32 %v116, 0.125
    %v118 = vmul.f32 %v110, %v110
    %v119 = vrot.slane %v118, 4
    %v120 = vadd.f32 %v118, %v119
    %v121 = vrot.slane %v120, 2
    %v122 = vadd.f32 %v120, %v121
    %v123 = vrot.slane %v122, 1
    %v124 = vadd.f32 %v122, %v123
    %v125 = vmul.f32 %v124, 0.125
    %v126 = vmul.f32 %v117, %v117
    %v127 = vsub.f32 %v125, %v126
    %v128 = vmax.f32 %v127, 0.0
    %v129 = vsub.f32 %v110, %v117
    %v130 = vadd.f32 %v128, 1e-05
    %v131 = vrsqrt.pop %v130
    %v132 = vmul.f32 %v129, %v131
    %v133 = vld [vmem:[%s3] sm:$0x1]
    %v134 = vmul.f32 %v133, 10.0
    %v135 = vld [vmem:[%s4] sm:$0x1]
    %v136 = vmul.f32 %v135, 10.0
    %v137 = vld [vmem:[%s5] sm:$0xff]
    %vm138 = vcmp.lt.u32.totalorder %v137, 429496729
    %v140 = vlaneseq
    %v141 = vshrl.u32 %v140, 7
    %v142 = vsub.s32 0, %v141
    %v143 = vrot.slane %v134, %v142
    %v145 = vmul.f32 %v132, %v143
    %v147 = vlaneseq
    %v148 = vshrl.u32 %v147, 7
    %v149 = vsub.s32 0, %v148
    %v150 = vrot.slane %v136, %v149
    %v152 = vadd.f32 %v145, %v150
    %v153 = vsel %vm138, %v152, 0.0
    %154 = vst [vmem:[#allocation7] sm:$0xff] %v153
    // Predicated region
    $region34: #{tpu_custom_call.1} parent=1 // pred_check
      _
    $region35: #{tpu_custom_call.1} parent=1 // pred_check_branch
      %156 = sbr.rel (0) target = $region37
    $region36: #{tpu_custom_call.1} parent=1 // pred_region
      %s158 = ssub.s32 128, 128
      %159 = vsyncadd [#allocation4], %s158
      %s161 = sshll.u32 [#allocation7], 4
      %s162 = int_to_ptr.vmem [resolvable:$true] %s161
      %164 = dma.vmem_to_hbm [thread:$0]  %s162, 128, %s6, [#allocation4]
    $region37: #{tpu_custom_call.1} parent=1 // pred_fallthru
      _
    // Predicated region
    $region38: #{tpu_custom_call.1} parent=1 // pred_check
      _
    $region39: #{tpu_custom_call.1} parent=1 // pred_check_branch
      %166 = sbr.rel (0) target = $region41
    $region40: #{tpu_custom_call.1} parent=1 // pred_region
      %167 = dma.done [#allocation4], 128
    $region41: #{tpu_custom_call.1} parent=1 // pred_fallthru
      _
    %168 = vsyncpa [#allocation3], 1
    %169 = vsyncpa [#allocation6], 1
    %170 = vsyncpa [#allocation4], 1

</llo_original>
